<compile_context>
chip_gen: v6e
topology: v6e:2x2x1
jax: 0.10.0
libtpu: 0.0.40
codegen_flags: <defaults>
</compile_context>

<pallas_src>
import functools

import jax
import jax.numpy as jnp
from jax.experimental import pallas as pl
from jax.experimental.pallas import tpu as pltpu


def _group_norm_kernel(x_ref, gamma_ref, beta_ref, o_ref, gamma_sc, beta_sc,
                       *, eps, hw):
    """One grid step: normalize a (bb, gb, L) block of (batch, group) rows.

    x_ref:     (bb, gb, L)  lane-dense, L = Cg*H*W, one (batch, group) per row
    gamma_ref: (gb, Cg)     compact per-channel scale (tiny block)
    beta_ref:  (gb, Cg)     compact per-channel shift
    gamma_sc / beta_sc: (gb, L) f32 scratch with lane-expanded params; rebuilt
                        only when the group block changes (batch index == 0).
    """
    gb, L = gamma_sc.shape
    cg = L // hw

    # Expand compact per-channel params into the lane-dense (gb, L) layout once
    # per group block.  Batch is the inner grid axis, so for all other batch
    # steps the params stay resident in VMEM scratch (no re-DMA, no re-expand).
    @pl.when(pl.program_id(1) == 0)
    def _expand_params():
        gamma = gamma_ref[...].astype(jnp.float32)          # (gb, Cg)
        beta = beta_ref[...].astype(jnp.float32)             # (gb, Cg)
        lane = jax.lax.broadcasted_iota(jnp.int32, (gb, L), 1)
        gfull = jnp.zeros((gb, L), jnp.float32)
        bfull = jnp.zeros((gb, L), jnp.float32)
        for c in range(cg):  # static unroll; cheap VPU selects, once per group block
            sel = (lane >= c * hw) & (lane < (c + 1) * hw)
            gfull = jnp.where(sel, gamma[:, c:c + 1], gfull)
            bfull = jnp.where(sel, beta[:, c:c + 1], bfull)
        gamma_sc[...] = gfull
        beta_sc[...] = bfull

    x = x_ref[...].astype(jnp.float32)
    # Two-pass (numerically stable) biased mean/var per group -> matches torch.
    mean = jnp.mean(x, axis=-1, keepdims=True)
    centered = x - mean
    var = jnp.mean(centered * centered, axis=-1, keepdims=True)
    xn = centered * jax.lax.rsqrt(var + eps)
    o_ref[...] = (xn * gamma_sc[...][None] + beta_sc[...][None]).astype(o_ref.dtype)


def _vmem_limit_bytes():
    """Generation-aware scoped-VMEM limit: 64 MiB on 128-MiB parts (v5e/v6e),
    32 MiB on 64-MiB parts (v7x), 32 MiB conservative fallback."""
    cap = None
    try:
        info = pltpu.get_tpu_info()
        cap = getattr(info, "vmem_capacity_bytes", None)
    except Exception:
        cap = None
    if not cap:
        cap = 64 * 1024 * 1024  # conservative: v7x per-TC physical VMEM
    return max(16 * 1024 * 1024, min(64 * 1024 * 1024, int(cap) // 2))


def _num_tensorcores():
    """Best-effort TensorCore count of the local device (1 on v5e/v6e, 2 on v7x)."""
    try:
        info = pltpu.get_tpu_info()
        for attr in ("num_cores", "core_count", "num_tensorcores", "tensorcore_count"):
            v = getattr(info, attr, None)
            if isinstance(v, int) and v > 0:
                return v
    except Exception:
        pass
    try:
        v = getattr(jax.devices()[0], "num_cores", None)
        if isinstance(v, int) and v > 0:
            return v
    except Exception:
        pass
    return 1


def _block_fits(bb, gb, L, in_bytes, usable):
    # Double-buffered x-in + out (2x each) + ~3 f32 block-sized temporaries
    # (upcast, centered, normalized) + resident f32 param scratch + slack.
    work = bb * gb * L * (4 * in_bytes + 12)
    scratch = 2 * gb * L * 4
    misc = 256 * 1024
    return work + scratch + misc <= usable


def group_norm(x, gamma, beta, num_groups: int, eps: float = 1e-6):
    """GroupNorm forward. x: (B, C, H, W); gamma/beta: (C,)."""
    B, C, H, W = x.shape
    G = num_groups
    assert C % G == 0, "in_channels must be divisible by num_groups"
    Cg = C // G
    HW = H * W
    L = Cg * HW  # lane-dense width of one group
    # TODO(synk): for odd spatial sizes where L % 128 != 0, pad HW (with masked
    # mean/var) so output stores stay unmasked full-lane vst; correctness is
    # unaffected without the padding (block spans the full L dim).

    # Lane-dense activations; compact params (no (G, L) HBM broadcast).
    xr = x.reshape(B, G, L)
    gr = gamma.reshape(G, Cg)
    br = beta.reshape(G, Cg)

    vmem_limit = _vmem_limit_bytes()
    usable = int(0.8 * vmem_limit)
    in_bytes = x.dtype.itemsize

    # gb must equal G or be a multiple of 8 (sublane tiling constraint).
    group_cands = [d for d in range(G, 0, -1) if G % d == 0 and (d == G or d % 8 == 0)]
    gb = next((d for d in group_cands if _block_fits(1, d, L, in_bytes, usable)),
              group_cands[-1])
    # TODO(synk): if even the smallest legal group block exceeds the budget
    # (huge H*W), add an inner "arbitrary" L-chunk grid axis with sum/sumsq
    # scratch accumulators (streamed two-pass) instead of whole-row blocks.
    bb = next((d for d in range(B, 0, -1)
               if B % d == 0 and _block_fits(d, gb, L, in_bytes, usable)), 1)

    # Only on multi-TensorCore parts (v7x): ensure the "parallel" group axis
    # has at least one step per core.  On 1-TC parts an extra grid step is
    # pure per-step overhead, so keep the biggest single block there.
    n_cores = _num_tensorcores()
    if n_cores >= 2 and (G // gb) < n_cores:
        smaller = [d for d in range(1, gb)
                   if G % d == 0 and d % 8 == 0 and (G // d) >= n_cores]
        if smaller:
            gb = max(smaller)

    # Group axis outer ("parallel" -> megacore shard), batch axis innermost so
    # gamma/beta block indices are unchanged across consecutive steps (re-DMA
    # elided) and the VMEM param scratch stays valid.
    grid = (G // gb, B // bb)

    out = pl.pallas_call(
        functools.partial(_group_norm_kernel, eps=eps, hw=HW),
        out_shape=jax.ShapeDtypeStruct(xr.shape, x.dtype),
        grid_spec=pltpu.PrefetchScalarGridSpec(
            num_scalar_prefetch=0,
            grid=grid,
            in_specs=[
                pl.BlockSpec((bb, gb, L), lambda j, i: (i, j, 0)),
                pl.BlockSpec((gb, Cg), lambda j, i: (j, 0)),
                pl.BlockSpec((gb, Cg), lambda j, i: (j, 0)),
            ],
            out_specs=pl.BlockSpec((bb, gb, L), lambda j, i: (i, j, 0)),
            scratch_shapes=[
                pltpu.VMEM((gb, L), jnp.float32),  # lane-expanded gamma
                pltpu.VMEM((gb, L), jnp.float32),  # lane-expanded beta
            ],
        ),
        compiler_params=pltpu.CompilerParams(
            dimension_semantics=("parallel", "arbitrary"),
            vmem_limit_bytes=vmem_limit,
        ),
    )(xr, gr, br)

    return out.reshape(B, C, H, W)


def _group_norm_ref(x, gamma, beta, num_groups, eps=1e-6):
    B, C, H, W = x.shape
    G = num_groups
    xr = x.reshape(B, G, -1).astype(jnp.float32)
    mean = xr.mean(axis=-1, keepdims=True)
    var = ((xr - mean) ** 2).mean(axis=-1, keepdims=True)
    xn = ((xr - mean) * jax.lax.rsqrt(var + eps)).reshape(B, C, H, W)
    return (xn * gamma[None, :, None, None] + beta[None, :, None, None]).astype(x.dtype)


if __name__ == "__main__":
    # Module config: GroupNorm(in_channels=64) -> nn.GroupNorm(32, 64, eps=1e-6, affine=True)
    in_channels = 64
    num_groups = 32
    B, H, W = 2, 16, 16

    key = jax.random.PRNGKey(0)
    kx, kg, kb = jax.random.split(key, 3)
    x = jax.random.normal(kx, (B, in_channels, H, W), dtype=jnp.float32)
    # PyTorch default affine init is ones/zeros; perturb so the affine path is exercised.
    gamma = jnp.ones((in_channels,), jnp.float32) + 0.1 * jax.random.normal(kg, (in_channels,))
    beta = 0.1 * jax.random.normal(kb, (in_channels,))

    out = group_norm(x, gamma, beta, num_groups)
    out = jax.block_until_ready(out)

    ref = _group_norm_ref(x, gamma, beta, num_groups)
    assert out.shape == (B, in_channels, H, W)
    assert jnp.allclose(out, ref, atol=1e-4, rtol=1e-4), "mismatch vs reference"

    print("KERNEL_OK")
</pallas_src>

<mosaic_0001>
module attributes {stable_mosaic.version = 11 : i64} {
  func.func @_group_norm_kernel(%arg0: i32, %arg1: i32, %arg2: memref<2x32x512xf32, #tpu.memory_space<vmem>>, %arg3: memref<32x2xf32, #tpu.memory_space<vmem>>, %arg4: memref<32x2xf32, #tpu.memory_space<vmem>>, %arg5: memref<2x32x512xf32, #tpu.memory_space<vmem>>, %arg6: memref<32x512xf32, #tpu.memory_space<vmem>>, %arg7: memref<32x512xf32, #tpu.memory_space<vmem>>) attributes {dimension_semantics = [#tpu.dimension_semantics<parallel>, #tpu.dimension_semantics<arbitrary>], iteration_bounds = array<i64: 1, 1>, scalar_prefetch = 0 : i64, scratch_operands = 2 : i64, tpu.core_type = #tpu.core_type<tc>, window_params = [{transform_indices = @transform_0, window_bounds = array<i64: 2, 32, 512>}, {transform_indices = @transform_1, window_bounds = array<i64: 32, 2>}, {transform_indices = @transform_2, window_bounds = array<i64: 32, 2>}, {transform_indices = @transform_3, window_bounds = array<i64: 2, 32, 512>}]} {
    %c0_i32 = arith.constant 0 : i32
    %0 = arith.cmpi eq, %arg1, %c0_i32 : i32
    %1 = arith.extui %0 : i1 to i32
    %c0_i32_0 = arith.constant 0 : i32
    %2 = arith.cmpi ne, %1, %c0_i32_0 : i32
    scf.if %2 {
      %c0_14 = arith.constant 0 : index
      %c0_15 = arith.constant 0 : index
      %29 = vector.load %arg3[%c0_14, %c0_15] : memref<32x2xf32, #tpu.memory_space<vmem>>, vector<32x2xf32>
      %c0_16 = arith.constant 0 : index
      %c0_17 = arith.constant 0 : index
      %30 = vector.load %arg4[%c0_16, %c0_17] : memref<32x2xf32, #tpu.memory_space<vmem>>, vector<32x2xf32>
      %31 = tpu.iota {dimensions = array<i32: 1>} : vector<32x512xi32>
      %cst_18 = arith.constant 0.000000e+00 : f32
      %32 = vector.broadcast %cst_18 : f32 to vector<32x512xf32>
      %cst_19 = arith.constant 0.000000e+00 : f32
      %33 = vector.broadcast %cst_19 : f32 to vector<32x512xf32>
      %c0_i32_20 = arith.constant 0 : i32
      %34 = vector.broadcast %c0_i32_20 : i32 to vector<32x512xi32>
      %35 = arith.cmpi sge, %31, %34 : vector<32x512xi32>
      %c256_i32 = arith.constant 256 : i32
      %36 = vector.broadcast %c256_i32 : i32 to vector<32x512xi32>
      %37 = arith.cmpi slt, %31, %36 : vector<32x512xi32>
      %38 = arith.andi %35, %37 : vector<32x512xi1>
      %39 = vector.extract_strided_slice %29 {offsets = [0, 0], sizes = [32, 1], strides = [1, 1]} : vector<32x2xf32> to vector<32x1xf32>
      %40 = vector.shape_cast %39 : vector<32x1xf32> to vector<32x1xf32>
      %41 = vector.broadcast %40 : vector<32x1xf32> to vector<32x512xf32>
      %42 = arith.select %38, %41, %32 : vector<32x512xi1>, vector<32x512xf32>
      %43 = vector.extract_strided_slice %30 {offsets = [0, 0], sizes = [32, 1], strides = [1, 1]} : vector<32x2xf32> to vector<32x1xf32>
      %44 = vector.shape_cast %43 : vector<32x1xf32> to vector<32x1xf32>
      %45 = vector.broadcast %44 : vector<32x1xf32> to vector<32x512xf32>
      %46 = arith.select %38, %45, %33 : vector<32x512xi1>, vector<32x512xf32>
      %c256_i32_21 = arith.constant 256 : i32
      %47 = vector.broadcast %c256_i32_21 : i32 to vector<32x512xi32>
      %48 = arith.cmpi sge, %31, %47 : vector<32x512xi32>
      %c512_i32 = arith.constant 512 : i32
      %49 = vector.broadcast %c512_i32 : i32 to vector<32x512xi32>
      %50 = arith.cmpi slt, %31, %49 : vector<32x512xi32>
      %51 = arith.andi %48, %50 : vector<32x512xi1>
      %52 = vector.extract_strided_slice %29 {offsets = [0, 1], sizes = [32, 1], strides = [1, 1]} : vector<32x2xf32> to vector<32x1xf32>
      %53 = vector.shape_cast %52 : vector<32x1xf32> to vector<32x1xf32>
      %54 = vector.broadcast %53 : vector<32x1xf32> to vector<32x512xf32>
      %55 = arith.select %51, %54, %42 : vector<32x512xi1>, vector<32x512xf32>
      %56 = vector.extract_strided_slice %30 {offsets = [0, 1], sizes = [32, 1], strides = [1, 1]} : vector<32x2xf32> to vector<32x1xf32>
      %57 = vector.shape_cast %56 : vector<32x1xf32> to vector<32x1xf32>
      %58 = vector.broadcast %57 : vector<32x1xf32> to vector<32x512xf32>
      %59 = arith.select %51, %58, %46 : vector<32x512xi1>, vector<32x512xf32>
      %c0_22 = arith.constant 0 : index
      %c0_23 = arith.constant 0 : index
      %60 = vector.load %arg6[%c0_22, %c0_23] : memref<32x512xf32, #tpu.memory_space<vmem>>, vector<32x512xf32>
      tpu.vector_store %arg6[%c0_22, %c0_23], %55 {strides = array<i32>} : memref<32x512xf32, #tpu.memory_space<vmem>>, vector<32x512xf32>,
      %c0_24 = arith.constant 0 : index
      %c0_25 = arith.constant 0 : index
      %61 = vector.load %arg7[%c0_24, %c0_25] : memref<32x512xf32, #tpu.memory_space<vmem>>, vector<32x512xf32>
      tpu.vector_store %arg7[%c0_24, %c0_25], %59 {strides = array<i32>} : memref<32x512xf32, #tpu.memory_space<vmem>>, vector<32x512xf32>,
    } else {
    }
    %c0 = arith.constant 0 : index
    %c0_1 = arith.constant 0 : index
    %c0_2 = arith.constant 0 : index
    %3 = vector.load %arg2[%c0, %c0_1, %c0_2] : memref<2x32x512xf32, #tpu.memory_space<vmem>>, vector<2x32x512xf32>
    %cst = arith.constant dense<0.000000e+00> : vector<2x32xf32>
    %4 = vector.multi_reduction <add>, %3, %cst [2] : vector<2x32x512xf32> to vector<2x32xf32>
    %5 = vector.shape_cast %4 : vector<2x32xf32> to vector<2x32x1xf32>
    %cst_3 = arith.constant 5.120000e+02 : f32
    %6 = vector.broadcast %cst_3 : f32 to vector<2x32x1xf32>
    %7 = arith.divf %5, %6 : vector<2x32x1xf32>
    %8 = vector.broadcast %7 : vector<2x32x1xf32> to vector<2x32x512xf32>
    %9 = arith.subf %3, %8 : vector<2x32x512xf32>
    %10 = arith.mulf %9, %9 : vector<2x32x512xf32>
    %cst_4 = arith.constant dense<0.000000e+00> : vector<2x32xf32>
    %11 = vector.multi_reduction <add>, %10, %cst_4 [2] : vector<2x32x512xf32> to vector<2x32xf32>
    %12 = vector.shape_cast %11 : vector<2x32xf32> to vector<2x32x1xf32>
    %cst_5 = arith.constant 5.120000e+02 : f32
    %13 = vector.broadcast %cst_5 : f32 to vector<2x32x1xf32>
    %14 = arith.divf %12, %13 : vector<2x32x1xf32>
    %cst_6 = arith.constant 9.99999997E-7 : f32
    %15 = vector.broadcast %cst_6 : f32 to vector<2x32x1xf32>
    %16 = arith.addf %14, %15 : vector<2x32x1xf32>
    %17 = math.rsqrt %16 : vector<2x32x1xf32>
    %18 = vector.broadcast %17 : vector<2x32x1xf32> to vector<2x32x512xf32>
    %19 = arith.mulf %9, %18 : vector<2x32x512xf32>
    %c0_7 = arith.constant 0 : index
    %c0_8 = arith.constant 0 : index
    %20 = vector.load %arg6[%c0_7, %c0_8] : memref<32x512xf32, #tpu.memory_space<vmem>>, vector<32x512xf32>
    %21 = vector.shape_cast %20 : vector<32x512xf32> to vector<1x32x512xf32>
    %22 = vector.broadcast %21 : vector<1x32x512xf32> to vector<2x32x512xf32>
    %23 = arith.mulf %19, %22 : vector<2x32x512xf32>
    %c0_9 = arith.constant 0 : index
    %c0_10 = arith.constant 0 : index
    %24 = vector.load %arg7[%c0_9, %c0_10] : memref<32x512xf32, #tpu.memory_space<vmem>>, vector<32x512xf32>
    %25 = vector.shape_cast %24 : vector<32x512xf32> to vector<1x32x512xf32>
    %26 = vector.broadcast %25 : vector<1x32x512xf32> to vector<2x32x512xf32>
    %27 = arith.addf %23, %26 : vector<2x32x512xf32>
    %c0_11 = arith.constant 0 : index
    %c0_12 = arith.constant 0 : index
    %c0_13 = arith.constant 0 : index
    %28 = vector.load %arg5[%c0_11, %c0_12, %c0_13] : memref<2x32x512xf32, #tpu.memory_space<vmem>>, vector<2x32x512xf32>
    tpu.vector_store %arg5[%c0_11, %c0_12, %c0_13], %27 {strides = array<i32>} : memref<2x32x512xf32, #tpu.memory_space<vmem>>, vector<2x32x512xf32>,
    return
  }
  func.func @transform_0(%arg0: i32, %arg1: i32) -> (i32, i32, i32) {
    %c0_i32 = arith.constant 0 : i32
    %c0_i32_0 = arith.constant 0 : i32
    return %arg1, %arg0, %c0_i32 : i32, i32, i32
  }
  func.func @transform_1(%arg0: i32, %arg1: i32) -> (i32, i32) {
    %c0_i32 = arith.constant 0 : i32
    %c0_i32_0 = arith.constant 0 : i32
    return %arg0, %c0_i32 : i32, i32
  }
  func.func @transform_2(%arg0: i32, %arg1: i32) -> (i32, i32) {
    %c0_i32 = arith.constant 0 : i32
    %c0_i32_0 = arith.constant 0 : i32
    return %arg0, %c0_i32 : i32, i32
  }
  func.func @transform_3(%arg0: i32, %arg1: i32) -> (i32, i32, i32) {
    %c0_i32 = arith.constant 0 : i32
    %c0_i32_0 = arith.constant 0 : i32
    return %arg1, %arg0, %c0_i32 : i32, i32, i32
  }
}

</mosaic_0001>

<llo_original>
// kernel: tpu_custom_call.1
$region0: #{tpu_custom_call.1}
  #allocation0 [shape = 'u32[]', space=smem, size = 0x4, offset = 0x4, fixed_abs, tag = 'smem constant byte address 0x4 - core index']
  #allocation1 [shape = 'u32[144,128]{1,0:T(1,128)}', space=vmem, size = 0x12000, scoped, tag = 'internal scratch']
  #allocation2 [shape = 'f32[32,512]{1,0:T(8,128)}', space=vmem, size = 0x10000, scoped, tag = 'scratch operand']
  #allocation3 [shape = 'f32[32,512]{1,0:T(8,128)}', space=vmem, size = 0x10000, scoped, tag = 'scratch operand']
  %s0 = inlined_call_operand.hbm [shape: f32[2,32,512], index: 0, kind: input, shape index: {}]
  %s1 = inlined_call_operand.vmem [shape: f32[32,2], index: 1, kind: input, shape index: {}]
  %s2 = inlined_call_operand.vmem [shape: f32[32,2], index: 2, kind: input, shape index: {}]
  %s3 = inlined_call_operand.hbm [shape: f32[2,32,512], index: 3, kind: output, shape index: {}]
  %s4 = sld [smem:[#allocation0]]
  $region30: #{tpu_custom_call.1} parent=0
    _
  %s6 = ssub.s32 1, %s4
  %s7 = scalar_select 0, %s6, %s4
  $region1: #{tpu_custom_call.1} parent=0
    #allocation4 [shape = 'u8[131072]{0}', space=vmem, size = 0x20000, scoped, tag = 'input window, operand 0, single buffered']
    #allocation5 [shape = 's32[1]{0}', space=sflag, size = 0x4, scoped, tag = 'scoped memory for tpu_custom_call.1']
    #allocation6 [shape = 's32[1]{0}', space=sflag, size = 0x4, scoped, tag = 'scoped memory for tpu_custom_call.1']
    #allocation7 [shape = 'u8[131072]{0}', space=vmem, size = 0x20000, scoped, tag = 'output window, operand 0, single buffered']
    %8 = vsyncpa [#allocation5], 0
    %9 = vsyncpa [#allocation6], 0
    // Predicated region
    $region2: #{tpu_custom_call.1} parent=1 // pred_check
      _
    $region3: #{tpu_custom_call.1} parent=1 // pred_check_branch
      %11 = sbr.rel (0) target = $region5
    $region4: #{tpu_custom_call.1} parent=1 // pred_region
      %s13 = ssub.s32 4096, 4096
      %14 = vsyncadd [#allocation5], %s13
      %s15 = sshll.u32 [#allocation4], 4
      %s16 = int_to_ptr.vmem [resolvable:$true] %s15
      %21 = dma.hbm_to_vmem [thread:$0]  %s0, 4096, %s16, [#allocation5], 512, 512, 32
    $region5: #{tpu_custom_call.1} parent=1 // pred_fallthru
      _
    // Predicated region
    $region6: #{tpu_custom_call.1} parent=1 // pred_check
      _
    $region7: #{tpu_custom_call.1} parent=1 // pred_check_branch
      %23 = sbr.rel (0) target = $region9
    $region8: #{tpu_custom_call.1} parent=1 // pred_region
      _
    $region9: #{tpu_custom_call.1} parent=1 // pred_fallthru
      _
    // Predicated region
    $region10: #{tpu_custom_call.1} parent=1 // pred_check
      _
    $region11: #{tpu_custom_call.1} parent=1 // pred_check_branch
      %25 = sbr.rel (0) target = $region13
    $region12: #{tpu_custom_call.1} parent=1 // pred_region
      _
    $region13: #{tpu_custom_call.1} parent=1 // pred_fallthru
      _
    // Predicated region
    $region14: #{tpu_custom_call.1} parent=1 // pred_check
      _
    $region15: #{tpu_custom_call.1} parent=1 // pred_check_branch
      %27 = sbr.rel (0) target = $region17
    $region16: #{tpu_custom_call.1} parent=1 // pred_region
      %28 = dma.done [#allocation5], 4096
    $region17: #{tpu_custom_call.1} parent=1 // pred_fallthru
      _
    %p29 = scmp.eq.s32.totalorder 0, 0
    // Predicated region
    $region18: #{tpu_custom_call.1} parent=1 // pred_check
      %p30 = pneg %p29
    $region19: #{tpu_custom_call.1} parent=1 // pred_check_branch
      %32 = sbr.rel (%p30) target = $region21
    $region20: #{tpu_custom_call.1} parent=1 // pred_region
      %v33 = vld [vmem:[%s1] sm:$0xff]
      %v34 = vld [vmem:[%s1 + $0x8] sm:$0xff]
      %v35 = vld [vmem:[%s1 + $0x10] sm:$0xff]
      %v36 = vld [vmem:[%s1 + $0x18] sm:$0xff]
      %v37 = vld [vmem:[%s2] sm:$0xff]
      %v38 = vld [vmem:[%s2 + $0x8] sm:$0xff]
      %v39 = vld [vmem:[%s2 + $0x10] sm:$0xff]
      %v40 = vld [vmem:[%s2 + $0x18] sm:$0xff]
      %v41 = vlaneseq
      %v42 = vand.u32 %v41, 127
      %v43 = vadd.s32 %v42, 128
      %v44 = vadd.s32 %v42, 256
      %v45 = vadd.s32 %v42, 384
      %vm46 = vcmp.ge.s32.totalorder %v42, 0
      %vm47 = vcmp.ge.s32.totalorder %v43, 0
      %vm48 = vcmp.ge.s32.totalorder %v44, 0
      %vm49 = vcmp.ge.s32.totalorder %v45, 0
      %vm50 = vcmp.lt.s32.totalorder %v42, 256
      %vm51 = vcmp.lt.s32.totalorder %v43, 256
      %vm52 = vcmp.lt.s32.totalorder %v44, 256
      %vm53 = vcmp.lt.s32.totalorder %v45, 256
      %vm54 = vmand %vm46, %vm50
      %vm55 = vmand %vm47, %vm51
      %vm56 = vmand %vm48, %vm52
      %vm57 = vmand %vm49, %vm53
      %59 = vset.pattern.permute.xlu0 0
      %60 = vperm.xlu0 %59, %v33
      %v61 = vpop.permute.xlu0 %60
      %64 = vset.pattern.permute.xlu0 0
      %65 = vperm.xlu0 %64, %v34
      %v66 = vpop.permute.xlu0 %65
      %69 = vset.pattern.permute.xlu0 0
      %70 = vperm.xlu0 %69, %v35
      %v71 = vpop.permute.xlu0 %70
      %74 = vset.pattern.permute.xlu0 0
      %75 = vperm.xlu0 %74, %v36
      %v76 = vpop.permute.xlu0 %75
      %v78 = vsel %vm54, %v61, 0.0
      %v79 = vsel %vm55, %v61, 0.0
      %v80 = vsel %vm56, %v61, 0.0
      %v81 = vsel %vm57, %v61, 0.0
      %v82 = vsel %vm54, %v66, 0.0
      %v83 = vsel %vm55, %v66, 0.0
      %v84 = vsel %vm56, %v66, 0.0
      %v85 = vsel %vm57, %v66, 0.0
      %v86 = vsel %vm54, %v71, 0.0
      %v87 = vsel %vm55, %v71, 0.0
      %v88 = vsel %vm56, %v71, 0.0
      %v89 = vsel %vm57, %v71, 0.0
      %v90 = vsel %vm54, %v76, 0.0
      %v91 = vsel %vm55, %v76, 0.0
      %v92 = vsel %vm56, %v76, 0.0
      %v93 = vsel %vm57, %v76, 0.0
      %95 = vset.pattern.permute.xlu0 0
      %96 = vperm.xlu0 %95, %v37
      %v97 = vpop.permute.xlu0 %96
      %100 = vset.pattern.permute.xlu0 0
      %101 = vperm.xlu0 %100, %v38
      %v102 = vpop.permute.xlu0 %101
      %105 = vset.pattern.permute.xlu0 0
      %106 = vperm.xlu0 %105, %v39
      %v107 = vpop.permute.xlu0 %106
      %110 = vset.pattern.permute.xlu0 0
      %111 = vperm.xlu0 %110, %v40
      %v112 = vpop.permute.xlu0 %111
      %v114 = vsel %vm54, %v97, 0.0
      %v115 = vsel %vm55, %v97, 0.0
      %v116 = vsel %vm56, %v97, 0.0
      %v117 = vsel %vm57, %v97, 0.0
      %v118 = vsel %vm54, %v102, 0.0
      %v119 = vsel %vm55, %v102, 0.0
      %v120 = vsel %vm56, %v102, 0.0
      %v121 = vsel %vm57, %v102, 0.0
      %v122 = vsel %vm54, %v107, 0.0
      %v123 = vsel %vm55, %v107, 0.0
      %v124 = vsel %vm56, %v107, 0.0
      %v125 = vsel %vm57, %v107, 0.0
      %v126 = vsel %vm54, %v112, 0.0
      %v127 = vsel %vm55, %v112, 0.0
      %v128 = vsel %vm56, %v112, 0.0
      %v129 = vsel %vm57, %v112, 0.0
      %vm130 = vcmp.ge.s32.totalorder %v42, 256
      %vm131 = vcmp.ge.s32.totalorder %v43, 256
      %vm132 = vcmp.ge.s32.totalorder %v44, 256
      %vm133 = vcmp.ge.s32.totalorder %v45, 256
      %vm134 = vcmp.lt.s32.totalorder %v42, 512
      %vm135 = vcmp.lt.s32.totalorder %v43, 512
      %vm136 = vcmp.lt.s32.totalorder %v44, 512
      %vm137 = vcmp.lt.s32.totalorder %v45, 512
      %vm138 = vmand %vm130, %vm134
      %vm139 = vmand %vm131, %vm135
      %vm140 = vmand %vm132, %vm136
      %vm141 = vmand %vm133, %vm137
      %142 = vset.pattern.permute.xlu0 1
      %143 = vperm.xlu0 %142, %v33
      %v144 = vpop.permute.xlu0 %143
      %146 = vset.pattern.permute.xlu0 1
      %147 = vperm.xlu0 %146, %v34
      %v148 = vpop.permute.xlu0 %147
      %150 = vset.pattern.permute.xlu0 1
      %151 = vperm.xlu0 %150, %v35
      %v152 = vpop.permute.xlu0 %151
      %154 = vset.pattern.permute.xlu0 1
      %155 = vperm.xlu0 %154, %v36
      %v156 = vpop.permute.xlu0 %155
      %v158 = vsel %vm138, %v144, %v78
      %v159 = vsel %vm139, %v144, %v79
      %v160 = vsel %vm140, %v144, %v80
      %v161 = vsel %vm141, %v144, %v81
      %v162 = vsel %vm138, %v148, %v82
      %v163 = vsel %vm139, %v148, %v83
      %v164 = vsel %vm140, %v148, %v84
      %v165 = vsel %vm141, %v148, %v85
      %v166 = vsel %vm138, %v152, %v86
      %v167 = vsel %vm139, %v152, %v87
      %v168 = vsel %vm140, %v152, %v88
      %v169 = vsel %vm141, %v152, %v89
      %v170 = vsel %vm138, %v156, %v90
      %v171 = vsel %vm139, %v156, %v91
      %v172 = vsel %vm140, %v156, %v92
      %v173 = vsel %vm141, %v156, %v93
      %174 = vset.pattern.permute.xlu0 1
      %175 = vperm.xlu0 %174, %v37
      %v176 = vpop.permute.xlu0 %175
      %178 = vset.pattern.permute.xlu0 1
      %179 = vperm.xlu0 %178, %v38
      %v180 = vpop.permute.xlu0 %179
      %182 = vset.pattern.permute.xlu0 1
      %183 = vperm.xlu0 %182, %v39
      %v184 = vpop.permute.xlu0 %183
      %186 = vset.pattern.permute.xlu0 1
      %187 = vperm.xlu0 %186, %v40
      %v188 = vpop.permute.xlu0 %187
      %v190 = vsel %vm138, %v176, %v114
      %v191 = vsel %vm139, %v176, %v115
      %v192 = vsel %vm140, %v176, %v116
      %v193 = vsel %vm141, %v176, %v117
      %v194 = vsel %vm138, %v180, %v118
      %v195 = vsel %vm139, %v180, %v119
      %v196 = vsel %vm140, %v180, %v120
      %v197 = vsel %vm141, %v180, %v121
      %v198 = vsel %vm138, %v184, %v122
      %v199 = vsel %vm139, %v184, %v123
      %v200 = vsel %vm140, %v184, %v124
      %v201 = vsel %vm141, %v184, %v125
      %v202 = vsel %vm138, %v188, %v126
      %v203 = vsel %vm139, %v188, %v127
      %v204 = vsel %vm140, %v188, %v128
      %v205 = vsel %vm141, %v188, %v129
      %206 = vst [vmem:[#allocation2] sm:$0xff] %v158
      %207 = vst [vmem:[#allocation2 + $0x8] sm:$0xff] %v159
      %208 = vst [vmem:[#allocation2 + $0x10] sm:$0xff] %v160
      %209 = vst [vmem:[#allocation2 + $0x18] sm:$0xff] %v161
      %210 = vst [vmem:[#allocation2 + $0x20] sm:$0xff] %v162
      %211 = vst [vmem:[#allocation2 + $0x28] sm:$0xff] %v163
      %212 = vst [vmem:[#allocation2 + $0x30] sm:$0xff] %v164
      %213 = vst [vmem:[#allocation2 + $0x38] sm:$0xff] %v165
      %214 = vst [vmem:[#allocation2 + $0x40] sm:$0xff] %v166
      %215 = vst [vmem:[#allocation2 + $0x48] sm:$0xff] %v167
      %216 = vst [vmem:[#allocation2 + $0x50] sm:$0xff] %v168
      %217 = vst [vmem:[#allocation2 + $0x58] sm:$0xff] %v169
      %218 = vst [vmem:[#allocation2 + $0x60] sm:$0xff] %v170
      %219 = vst [vmem:[#allocation2 + $0x68] sm:$0xff] %v171
      %220 = vst [vmem:[#allocation2 + $0x70] sm:$0xff] %v172
      %221 = vst [vmem:[#allocation2 + $0x78] sm:$0xff] %v173
      %222 = vst [vmem:[#allocation3] sm:$0xff] %v190
      %223 = vst [vmem:[#allocation3 + $0x8] sm:$0xff] %v191
      %224 = vst [vmem:[#allocation3 + $0x10] sm:$0xff] %v192
      %225 = vst [vmem:[#allocation3 + $0x18] sm:$0xff] %v193
      %226 = vst [vmem:[#allocation3 + $0x20] sm:$0xff] %v194
      %227 = vst [vmem:[#allocation3 + $0x28] sm:$0xff] %v195
      %228 = vst [vmem:[#allocation3 + $0x30] sm:$0xff] %v196
      %229 = vst [vmem:[#allocation3 + $0x38] sm:$0xff] %v197
      %230 = vst [vmem:[#allocation3 + $0x40] sm:$0xff] %v198
      %231 = vst [vmem:[#allocation3 + $0x48] sm:$0xff] %v199
      %232 = vst [vmem:[#allocation3 + $0x50] sm:$0xff] %v200
      %233 = vst [vmem:[#allocation3 + $0x58] sm:$0xff] %v201
      %234 = vst [vmem:[#allocation3 + $0x60] sm:$0xff] %v202
      %235 = vst [vmem:[#allocation3 + $0x68] sm:$0xff] %v203
      %236 = vst [vmem:[#allocation3 + $0x70] sm:$0xff] %v204
      %237 = vst [vmem:[#allocation3 + $0x78] sm:$0xff] %v205
    $region21: #{tpu_custom_call.1} parent=1 // pred_fallthru
      _
    %v238 = vld [vmem:[#allocation4] sm:$0xff]
    %v239 = vld [vmem:[#allocation4 + $0x8] sm:$0xff]
    %v240 = vld [vmem:[#allocation4 + $0x10] sm:$0xff]
    %v241 = vld [vmem:[#allocation4 + $0x18] sm:$0xff]
    %v242 = vld [vmem:[#allocation4 + $0x20] sm:$0xff]
    %v243 = vld [vmem:[#allocation4 + $0x28] sm:$0xff]
    %v244 = vld [vmem:[#allocation4 + $0x30] sm:$0xff]
    %v245 = vld [vmem:[#allocation4 + $0x38] sm:$0xff]
    %v246 = vld [vmem:[#allocation4 + $0x40] sm:$0xff]
    %v247 = vld [vmem:[#allocation4 + $0x48] sm:$0xff]
    %v248 = vld [vmem:[#allocation4 + $0x50] sm:$0xff]
    %v249 = vld [vmem:[#allocation4 + $0x58] sm:$0xff]
    %v250 = vld [vmem:[#allocation4 + $0x60] sm:$0xff]
    %v251 = vld [vmem:[#allocation4 + $0x68] sm:$0xff]
    %v252 = vld [vmem:[#allocation4 + $0x70] sm:$0xff]
    %v253 = vld [vmem:[#allocation4 + $0x78] sm:$0xff]
    %v254 = vld [vmem:[#allocation4 + $0x80] sm:$0xff]
    %v255 = vld [vmem:[#allocation4 + $0x88] sm:$0xff]
    %v256 = vld [vmem:[#allocation4 + $0x90] sm:$0xff]
    %v257 = vld [vmem:[#allocation4 + $0x98] sm:$0xff]
    %v258 = vld [vmem:[#allocation4 + $0xa0] sm:$0xff]
    %v259 = vld [vmem:[#allocation4 + $0xa8] sm:$0xff]
    %v260 = vld [vmem:[#allocation4 + $0xb0] sm:$0xff]
    %v261 = vld [vmem:[#allocation4 + $0xb8] sm:$0xff]
    %v262 = vld [vmem:[#allocation4 + $0xc0] sm:$0xff]
    %v263 = vld [vmem:[#allocation4 + $0xc8] sm:$0xff]
    %v264 = vld [vmem:[#allocation4 + $0xd0] sm:$0xff]
    %v265 = vld [vmem:[#allocation4 + $0xd8] sm:$0xff]
    %v266 = vld [vmem:[#allocation4 + $0xe0] sm:$0xff]
    %v267 = vld [vmem:[#allocation4 + $0xe8] sm:$0xff]
    %v268 = vld [vmem:[#allocation4 + $0xf0] sm:$0xff]
    %v269 = vld [vmem:[#allocation4 + $0xf8] sm:$0xff]
    %v270 = vadd.f32 %v238, %v239
    %v271 = vadd.f32 %v270, %v240
    %v272 = vadd.f32 %v271, %v241
    %273 = vadd.xlane.f32.xlu0 %v272
    %v274 = vpop.xlane.xlu0 %273
    %v275 = vadd.f32 %v242, %v243
    %v276 = vadd.f32 %v275, %v244
    %v277 = vadd.f32 %v276, %v245
    %278 = vadd.xlane.f32.xlu0 %v277
    %v279 = vpop.xlane.xlu0 %278
    %v280 = vadd.f32 %v246, %v247
    %v281 = vadd.f32 %v280, %v248
    %v282 = vadd.f32 %v281, %v249
    %283 = vadd.xlane.f32.xlu0 %v282
    %v284 = vpop.xlane.xlu0 %283
    %v285 = vadd.f32 %v250, %v251
    %v286 = vadd.f32 %v285, %v252
    %v287 = vadd.f32 %v286, %v253
    %288 = vadd.xlane.f32.xlu0 %v287
    %v289 = vpop.xlane.xlu0 %288
    %v290 = vadd.f32 %v254, %v255
    %v291 = vadd.f32 %v290, %v256
    %v292 = vadd.f32 %v291, %v257
    %293 = vadd.xlane.f32.xlu0 %v292
    %v294 = vpop.xlane.xlu0 %293
    %v295 = vadd.f32 %v258, %v259
    %v296 = vadd.f32 %v295, %v260
    %v297 = vadd.f32 %v296, %v261
    %298 = vadd.xlane.f32.xlu0 %v297
    %v299 = vpop.xlane.xlu0 %298
    %v300 = vadd.f32 %v262, %v263
    %v301 = vadd.f32 %v300, %v264
    %v302 = vadd.f32 %v301, %v265
    %303 = vadd.xlane.f32.xlu0 %v302
    %v304 = vpop.xlane.xlu0 %303
    %v305 = vadd.f32 %v266, %v267
    %v306 = vadd.f32 %v305, %v268
    %v307 = vadd.f32 %v306, %v269
    %308 = vadd.xlane.f32.xlu0 %v307
    %v309 = vpop.xlane.xlu0 %308
    %v310 = vrcp.pop 512.0
    %v311 = vmul.f32 %v274, %v310
    %v312 = vmul.f32 %v279, %v310
    %v313 = vmul.f32 %v284, %v310
    %v314 = vmul.f32 %v289, %v310
    %v315 = vmul.f32 %v294, %v310
    %v316 = vmul.f32 %v299, %v310
    %v317 = vmul.f32 %v304, %v310
    %v318 = vmul.f32 %v309, %v310
    %v319 = vsub.f32 %v238, %v311
    %v320 = vsub.f32 %v239, %v311
    %v321 = vsub.f32 %v240, %v311
    %v322 = vsub.f32 %v241, %v311
    %v323 = vsub.f32 %v242, %v312
    %v324 = vsub.f32 %v243, %v312
    %v325 = vsub.f32 %v244, %v312
    %v326 = vsub.f32 %v245, %v312
    %v327 = vsub.f32 %v246, %v313
    %v328 = vsub.f32 %v247, %v313
    %v329 = vsub.f32 %v248, %v313
    %v330 = vsub.f32 %v249, %v313
    %v331 = vsub.f32 %v250, %v314
    %v332 = vsub.f32 %v251, %v314
    %v333 = vsub.f32 %v252, %v314
    %v334 = vsub.f32 %v253, %v314
    %v335 = vsub.f32 %v254, %v315
    %v336 = vsub.f32 %v255, %v315
    %v337 = vsub.f32 %v256, %v315
    %v338 = vsub.f32 %v257, %v315
    %v339 = vsub.f32 %v258, %v316
    %v340 = vsub.f32 %v259, %v316
    %v341 = vsub.f32 %v260, %v316
    %v342 = vsub.f32 %v261, %v316
    %v343 = vsub.f32 %v262, %v317
    %v344 = vsub.f32 %v263, %v317
    %v345 = vsub.f32 %v264, %v317
    %v346 = vsub.f32 %v265, %v317
    %v347 = vsub.f32 %v266, %v318
    %v348 = vsub.f32 %v267, %v318
    %v349 = vsub.f32 %v268, %v318
    %v350 = vsub.f32 %v269, %v318
    %v351 = vmul.f32 %v319, %v319
    %v352 = vmul.f32 %v320, %v320
    %v353 = vmul.f32 %v321, %v321
    %v354 = vmul.f32 %v322, %v322
    %v355 = vmul.f32 %v323, %v323
    %v356 = vmul.f32 %v324, %v324
    %v357 = vmul.f32 %v325, %v325
    %v358 = vmul.f32 %v326, %v326
    %v359 = vmul.f32 %v327, %v327
    %v360 = vmul.f32 %v328, %v328
    %v361 = vmul.f32 %v329, %v329
    %v362 = vmul.f32 %v330, %v330
    %v363 = vmul.f32 %v331, %v331
    %v364 = vmul.f32 %v332, %v332
    %v365 = vmul.f32 %v333, %v333
    %v366 = vmul.f32 %v334, %v334
    %v367 = vmul.f32 %v335, %v335
    %v368 = vmul.f32 %v336, %v336
    %v369 = vmul.f32 %v337, %v337
    %v370 = vmul.f32 %v338, %v338
    %v371 = vmul.f32 %v339, %v339
    %v372 = vmul.f32 %v340, %v340
    %v373 = vmul.f32 %v341, %v341
    %v374 = vmul.f32 %v342, %v342
    %v375 = vmul.f32 %v343, %v343
    %v376 = vmul.f32 %v344, %v344
    %v377 = vmul.f32 %v345, %v345
    %v378 = vmul.f32 %v346, %v346
    %v379 = vmul.f32 %v347, %v347
    %v380 = vmul.f32 %v348, %v348
    %v381 = vmul.f32 %v349, %v349
    %v382 = vmul.f32 %v350, %v350
    %v383 = vadd.f32 %v351, %v352
    %v384 = vadd.f32 %v383, %v353
    %v385 = vadd.f32 %v384, %v354
    %386 = vadd.xlane.f32.xlu0 %v385
    %v387 = vpop.xlane.xlu0 %386
    %v388 = vadd.f32 %v355, %v356
    %v389 = vadd.f32 %v388, %v357
    %v390 = vadd.f32 %v389, %v358
    %391 = vadd.xlane.f32.xlu0 %v390
    %v392 = vpop.xlane.xlu0 %391
    %v393 = vadd.f32 %v359, %v360
    %v394 = vadd.f32 %v393, %v361
    %v395 = vadd.f32 %v394, %v362
    %396 = vadd.xlane.f32.xlu0 %v395
    %v397 = vpop.xlane.xlu0 %396
    %v398 = vadd.f32 %v363, %v364
    %v399 = vadd.f32 %v398, %v365
    %v400 = vadd.f32 %v399, %v366
    %401 = vadd.xlane.f32.xlu0 %v400
    %v402 = vpop.xlane.xlu0 %401
    %v403 = vadd.f32 %v367, %v368
    %v404 = vadd.f32 %v403, %v369
    %v405 = vadd.f32 %v404, %v370
    %406 = vadd.xlane.f32.xlu0 %v405
    %v407 = vpop.xlane.xlu0 %406
    %v408 = vadd.f32 %v371, %v372
    %v409 = vadd.f32 %v408, %v373
    %v410 = vadd.f32 %v409, %v374
    %411 = vadd.xlane.f32.xlu0 %v410
    %v412 = vpop.xlane.xlu0 %411
    %v413 = vadd.f32 %v375, %v376
    %v414 = vadd.f32 %v413, %v377
    %v415 = vadd.f32 %v414, %v378
    %416 = vadd.xlane.f32.xlu0 %v415
    %v417 = vpop.xlane.xlu0 %416
    %v418 = vadd.f32 %v379, %v380
    %v419 = vadd.f32 %v418, %v381
    %v420 = vadd.f32 %v419, %v382
    %421 = vadd.xlane.f32.xlu0 %v420
    %v422 = vpop.xlane.xlu0 %421
    %v423 = vmul.f32 %v387, %v310
    %v424 = vmul.f32 %v392, %v310
    %v425 = vmul.f32 %v397, %v310
    %v426 = vmul.f32 %v402, %v310
    %v427 = vmul.f32 %v407, %v310
    %v428 = vmul.f32 %v412, %v310
    %v429 = vmul.f32 %v417, %v310
    %v430 = vmul.f32 %v422, %v310
    %v431 = vadd.f32 %v423, 1e-06
    %v432 = vadd.f32 %v424, 1e-06
    %v433 = vadd.f32 %v425, 1e-06
    %v434 = vadd.f32 %v426, 1e-06
    %v435 = vadd.f32 %v427, 1e-06
    %v436 = vadd.f32 %v428, 1e-06
    %v437 = vadd.f32 %v429, 1e-06
    %v438 = vadd.f32 %v430, 1e-06
    %v439 = vrsqrt.pop %v431
    %v440 = vrsqrt.pop %v432
    %v441 = vrsqrt.pop %v433
    %v442 = vrsqrt.pop %v434
    %v443 = vrsqrt.pop %v435
    %v444 = vrsqrt.pop %v436
    %v445 = vrsqrt.pop %v437
    %v446 = vrsqrt.pop %v438
    %v447 = vmul.f32 %v319, %v439
    %v448 = vmul.f32 %v320, %v439
    %v449 = vmul.f32 %v321, %v439
    %v450 = vmul.f32 %v322, %v439
    %v451 = vmul.f32 %v323, %v440
    %v452 = vmul.f32 %v324, %v440
    %v453 = vmul.f32 %v325, %v440
    %v454 = vmul.f32 %v326, %v440
    %v455 = vmul.f32 %v327, %v441
    %v456 = vmul.f32 %v328, %v441
    %v457 = vmul.f32 %v329, %v441
    %v458 = vmul.f32 %v330, %v441
    %v459 = vmul.f32 %v331, %v442
    %v460 = vmul.f32 %v332, %v442
    %v461 = vmul.f32 %v333, %v442
    %v462 = vmul.f32 %v334, %v442
    %v463 = vmul.f32 %v335, %v443
    %v464 = vmul.f32 %v336, %v443
    %v465 = vmul.f32 %v337, %v443
    %v466 = vmul.f32 %v338, %v443
    %v467 = vmul.f32 %v339, %v444
    %v468 = vmul.f32 %v340, %v444
    %v469 = vmul.f32 %v341, %v444
    %v470 = vmul.f32 %v342, %v444
    %v471 = vmul.f32 %v343, %v445
    %v472 = vmul.f32 %v344, %v445
    %v473 = vmul.f32 %v345, %v445
    %v474 = vmul.f32 %v346, %v445
    %v475 = vmul.f32 %v347, %v446
    %v476 = vmul.f32 %v348, %v446
    %v477 = vmul.f32 %v349, %v446
    %v478 = vmul.f32 %v350, %v446
    %v479 = vld [vmem:[#allocation2] sm:$0xff]
    %v480 = vld [vmem:[#allocation2 + $0x8] sm:$0xff]
    %v481 = vld [vmem:[#allocation2 + $0x10] sm:$0xff]
    %v482 = vld [vmem:[#allocation2 + $0x18] sm:$0xff]
    %v483 = vld [vmem:[#allocation2 + $0x20] sm:$0xff]
    %v484 = vld [vmem:[#allocation2 + $0x28] sm:$0xff]
    %v485 = vld [vmem:[#allocation2 + $0x30] sm:$0xff]
    %v486 = vld [vmem:[#allocation2 + $0x38] sm:$0xff]
    %v487 = vld [vmem:[#allocation2 + $0x40] sm:$0xff]
    %v488 = vld [vmem:[#allocation2 + $0x48] sm:$0xff]
    %v489 = vld [vmem:[#allocation2 + $0x50] sm:$0xff]
    %v490 = vld [vmem:[#allocation2 + $0x58] sm:$0xff]
    %v491 = vld [vmem:[#allocation2 + $0x60] sm:$0xff]
    %v492 = vld [vmem:[#allocation2 + $0x68] sm:$0xff]
    %v493 = vld [vmem:[#allocation2 + $0x70] sm:$0xff]
    %v494 = vld [vmem:[#allocation2 + $0x78] sm:$0xff]
    %v495 = vmul.f32 %v447, %v479
    %v496 = vmul.f32 %v448, %v480
    %v497 = vmul.f32 %v449, %v481
    %v498 = vmul.f32 %v450, %v482
    %v499 = vmul.f32 %v451, %v483
    %v500 = vmul.f32 %v452, %v484
    %v501 = vmul.f32 %v453, %v485
    %v502 = vmul.f32 %v454, %v486
    %v503 = vmul.f32 %v455, %v487
    %v504 = vmul.f32 %v456, %v488
    %v505 = vmul.f32 %v457, %v489
    %v506 = vmul.f32 %v458, %v490
    %v507 = vmul.f32 %v459, %v491
    %v508 = vmul.f32 %v460, %v492
    %v509 = vmul.f32 %v461, %v493
    %v510 = vmul.f32 %v462, %v494
    %v511 = vmul.f32 %v463, %v479
    %v512 = vmul.f32 %v464, %v480
    %v513 = vmul.f32 %v465, %v481
    %v514 = vmul.f32 %v466, %v482
    %v515 = vmul.f32 %v467, %v483
    %v516 = vmul.f32 %v468, %v484
    %v517 = vmul.f32 %v469, %v485
    %v518 = vmul.f32 %v470, %v486
    %v519 = vmul.f32 %v471, %v487
    %v520 = vmul.f32 %v472, %v488
    %v521 = vmul.f32 %v473, %v489
    %v522 = vmul.f32 %v474, %v490
    %v523 = vmul.f32 %v475, %v491
    %v524 = vmul.f32 %v476, %v492
    %v525 = vmul.f32 %v477, %v493
    %v526 = vmul.f32 %v478, %v494
    %v527 = vld [vmem:[#allocation3] sm:$0xff]
    %v528 = vld [vmem:[#allocation3 + $0x8] sm:$0xff]
    %v529 = vld [vmem:[#allocation3 + $0x10] sm:$0xff]
    %v530 = vld [vmem:[#allocation3 + $0x18] sm:$0xff]
    %v531 = vld [vmem:[#allocation3 + $0x20] sm:$0xff]
    %v532 = vld [vmem:[#allocation3 + $0x28] sm:$0xff]
    %v533 = vld [vmem:[#allocation3 + $0x30] sm:$0xff]
    %v534 = vld [vmem:[#allocation3 + $0x38] sm:$0xff]
    %v535 = vld [vmem:[#allocation3 + $0x40] sm:$0xff]
    %v536 = vld [vmem:[#allocation3 + $0x48] sm:$0xff]
    %v537 = vld [vmem:[#allocation3 + $0x50] sm:$0xff]
    %v538 = vld [vmem:[#allocation3 + $0x58] sm:$0xff]
    %v539 = vld [vmem:[#allocation3 + $0x60] sm:$0xff]
    %v540 = vld [vmem:[#allocation3 + $0x68] sm:$0xff]
    %v541 = vld [vmem:[#allocation3 + $0x70] sm:$0xff]
    %v542 = vld [vmem:[#allocation3 + $0x78] sm:$0xff]
    %v543 = vadd.f32 %v495, %v527
    %v544 = vadd.f32 %v496, %v528
    %v545 = vadd.f32 %v497, %v529
    %v546 = vadd.f32 %v498, %v530
    %v547 = vadd.f32 %v499, %v531
    %v548 = vadd.f32 %v500, %v532
    %v549 = vadd.f32 %v501, %v533
    %v550 = vadd.f32 %v502, %v534
    %v551 = vadd.f32 %v503, %v535
    %v552 = vadd.f32 %v504, %v536
    %v553 = vadd.f32 %v505, %v537
    %v554 = vadd.f32 %v506, %v538
    %v555 = vadd.f32 %v507, %v539
    %v556 = vadd.f32 %v508, %v540
    %v557 = vadd.f32 %v509, %v541
    %v558 = vadd.f32 %v510, %v542
    %v559 = vadd.f32 %v511, %v527
    %v560 = vadd.f32 %v512, %v528
    %v561 = vadd.f32 %v513, %v529
    %v562 = vadd.f32 %v514, %v530
    %v563 = vadd.f32 %v515, %v531
    %v564 = vadd.f32 %v516, %v532
    %v565 = vadd.f32 %v517, %v533
    %v566 = vadd.f32 %v518, %v534
    %v567 = vadd.f32 %v519, %v535
    %v568 = vadd.f32 %v520, %v536
    %v569 = vadd.f32 %v521, %v537
    %v570 = vadd.f32 %v522, %v538
    %v571 = vadd.f32 %v523, %v539
    %v572 = vadd.f32 %v524, %v540
    %v573 = vadd.f32 %v525, %v541
    %v574 = vadd.f32 %v526, %v542
    %575 = vst [vmem:[#allocation7] sm:$0xff] %v543
    %576 = vst [vmem:[#allocation7 + $0x8] sm:$0xff] %v544
    %577 = vst [vmem:[#allocation7 + $0x10] sm:$0xff] %v545
    %578 = vst [vmem:[#allocation7 + $0x18] sm:$0xff] %v546
    %579 = vst [vmem:[#allocation7 + $0x20] sm:$0xff] %v547
    %580 = vst [vmem:[#allocation7 + $0x28] sm:$0xff] %v548
    %581 = vst [vmem:[#allocation7 + $0x30] sm:$0xff] %v549
    %582 = vst [vmem:[#allocation7 + $0x38] sm:$0xff] %v550
    %583 = vst [vmem:[#allocation7 + $0x40] sm:$0xff] %v551
    %584 = vst [vmem:[#allocation7 + $0x48] sm:$0xff] %v552
    %585 = vst [vmem:[#allocation7 + $0x50] sm:$0xff] %v553
    %586 = vst [vmem:[#allocation7 + $0x58] sm:$0xff] %v554
    %587 = vst [vmem:[#allocation7 + $0x60] sm:$0xff] %v555
    %588 = vst [vmem:[#allocation7 + $0x68] sm:$0xff] %v556
    %589 = vst [vmem:[#allocation7 + $0x70] sm:$0xff] %v557
    %590 = vst [vmem:[#allocation7 + $0x78] sm:$0xff] %v558
    %591 = vst [vmem:[#allocation7 + $0x80] sm:$0xff] %v559
    %592 = vst [vmem:[#allocation7 + $0x88] sm:$0xff] %v560
    %593 = vst [vmem:[#allocation7 + $0x90] sm:$0xff] %v561
    %594 = vst [vmem:[#allocation7 + $0x98] sm:$0xff] %v562
    %595 = vst [vmem:[#allocation7 + $0xa0] sm:$0xff] %v563
    %596 = vst [vmem:[#allocation7 + $0xa8] sm:$0xff] %v564
    %597 = vst [vmem:[#allocation7 + $0xb0] sm:$0xff] %v565
    %598 = vst [vmem:[#allocation7 + $0xb8] sm:$0xff] %v566
    %599 = vst [vmem:[#allocation7 + $0xc0] sm:$0xff] %v567
    %600 = vst [vmem:[#allocation7 + $0xc8] sm:$0xff] %v568
    %601 = vst [vmem:[#allocation7 + $0xd0] sm:$0xff] %v569
    %602 = vst [vmem:[#allocation7 + $0xd8] sm:$0xff] %v570
    %603 = vst [vmem:[#allocation7 + $0xe0] sm:$0xff] %v571
    %604 = vst [vmem:[#allocation7 + $0xe8] sm:$0xff] %v572
    %605 = vst [vmem:[#allocation7 + $0xf0] sm:$0xff] %v573
    %606 = vst [vmem:[#allocation7 + $0xf8] sm:$0xff] %v574
    // Predicated region
    $region22: #{tpu_custom_call.1} parent=1 // pred_check
      _
    $region23: #{tpu_custom_call.1} parent=1 // pred_check_branch
      %608 = sbr.rel (0) target = $region25
    $region24: #{tpu_custom_call.1} parent=1 // pred_region
      %s610 = ssub.s32 4096, 4096
      %611 = vsyncadd [#allocation6], %s610
      %s612 = sshll.u32 [#allocation7], 4
      %s613 = int_to_ptr.vmem [resolvable:$true] %s612
      %618 = dma.vmem_to_hbm [thread:$0]  %s613, 4096, %s3, [#allocation6], 512, 512, 32
    $region25: #{tpu_custom_call.1} parent=1 // pred_fallthru
      _
    // Predicated region
    $region26: #{tpu_custom_call.1} parent=1 // pred_check
      _
    $region27: #{tpu_custom_call.1} parent=1 // pred_check_branch
      %620 = sbr.rel (0) target = $region29
    $region28: #{tpu_custom_call.1} parent=1 // pred_region
      %621 = dma.done [#allocation6], 4096
    $region29: #{tpu_custom_call.1} parent=1 // pred_fallthru
      _
    %622 = vsyncpa [#allocation5], 1
    %623 = vsyncpa [#allocation6], 1

</llo_original>
